<compile_context>
chip_gen: v7x
topology: tpu7x:2x2x1
jax: 0.10.0
libtpu: 0.0.40
codegen_flags: <defaults>
</compile_context>

<pallas_src>
import jax
import jax.numpy as jnp
from jax.experimental import pallas as pl
from jax.experimental.pallas import tpu as pltpu

_N_OUT = 4            # 3 channels from conv1 + 1 channel from conv2
_LANE = 128
_CHUNK = 64           # sublanes per inner compute chunk (8 f32 vregs / channel)
_UNROLL_CIN_MAX = 16  # statically unroll the channel loop up to this Cin
_VMEM_BUDGET = 12 << 20        # double-buffered pipeline working set (fits v5e default)
_TARGET_STEP_IN_BYTES = 2 << 20  # >= ~2 MiB of input HBM traffic per grid step


def _head3_kernel(w_ref, b_ref, x_ref, o_ref):
    # w_ref: (4, Cin) f32 SMEM     b_ref: (4,) f32 SMEM
    # x_ref: (Cin, S, 128) VMEM    o_ref: (4, S, 128) VMEM
    cin, s, _ = x_ref.shape
    n_out = o_ref.shape[0]

    def do_chunk(row0, rows):
        # Channel-outer contraction: each input chunk is read from VMEM exactly
        # once and FMA'd (VPU scalar-broadcast) into the 4 output accumulators.
        x0 = x_ref[0, pl.ds(row0, rows), :].astype(jnp.float32)
        accs = [x0 * w_ref[o, 0] + b_ref[o] for o in range(n_out)]  # bias folded in

        def fma(c, accs):
            xc = x_ref[c, pl.ds(row0, rows), :].astype(jnp.float32)
            return [accs[o] + xc * w_ref[o, c] for o in range(n_out)]

        if cin <= _UNROLL_CIN_MAX:
            for c in range(1, cin):                 # static unroll: full LLO visibility
                accs = fma(c, accs)
        else:
            accs = list(jax.lax.fori_loop(
                1, cin, lambda c, t: tuple(fma(c, list(t))), tuple(accs)))

        for o in range(n_out):                      # dense (rows, 128) slab stores
            o_ref[o, pl.ds(row0, rows), :] = accs[o].astype(o_ref.dtype)

    chunk = min(_CHUNK, s)
    n_full = s // chunk

    if n_full == 1:
        do_chunk(0, chunk)
    else:
        def chunk_body(i, carry):
            do_chunk(pl.multiple_of(i * chunk, chunk), chunk)
            return carry
        jax.lax.fori_loop(0, n_full, chunk_body, 0)

    rem = s - n_full * chunk
    if rem:
        do_chunk(n_full * chunk, rem)


def dglnet_head3(x_nchw, w1, b1, w2, b2):
    """x_nchw: (N, Cin, H, W). Returns (N, 4, H, W) = concat(conv1(x), conv2(conv1(x)))."""
    N, Cin, H, W = x_nchw.shape
    HW = H * W
    itemsize = x_nchw.dtype.itemsize

    # --- Fuse the two 1x1 convs into one (4, Cin) weight / (4,) bias (tiny XLA prep).
    w1_m = w1.reshape(3, Cin).astype(jnp.float32)            # (3, Cin)
    w2_m = w2.reshape(1, 3).astype(jnp.float32)              # (1, 3)
    b1_f = b1.astype(jnp.float32)                            # (3,)
    b2_f = b2.astype(jnp.float32)                            # (1,)
    w_fused = jnp.concatenate([w1_m, w2_m @ w1_m], axis=0)          # (4, Cin) long axis last
    b_fused = jnp.concatenate([b1_f, w2_m @ b1_f + b2_f], axis=0)   # (4,)

    # --- Pixel tiling: dense (S, 128) slabs, NCHW-native (no transposes anywhere).
    n_slabs = -(-HW // _LANE)

    per_slab_vmem = 2 * (Cin + _N_OUT) * _LANE * itemsize    # double-buffered in + out
    s_vmem = max(_CHUNK, (_VMEM_BUDGET // per_slab_vmem) // _CHUNK * _CHUNK)
    slab_in_bytes = Cin * _LANE * itemsize
    s_target = -(-_TARGET_STEP_IN_BYTES // slab_in_bytes)
    s_target = max(_CHUNK, -(-s_target // _CHUNK) * _CHUNK)
    s_cap = min(s_vmem, s_target)

    if n_slabs <= s_cap:
        S = n_slabs            # single block spans all slabs (block dim == full dim)
        n_blocks = 1
    else:
        S = s_cap
        n_blocks = -(-n_slabs // S)

    # Keep >= 2 parallel grid steps so v7x megacore (2 TCs) can shard the work.
    if N * n_blocks < 2 and n_slabs >= 2 * _CHUNK:
        half = -(-n_slabs // 2)
        S = -(-half // _CHUNK) * _CHUNK
        n_blocks = -(-n_slabs // S)

    slabs_pad = n_blocks * S
    hw_pad = slabs_pad * _LANE

    x_flat = x_nchw.reshape(N, Cin, HW)
    if hw_pad != HW:
        # Ragged-tail fallback only; the aligned case (HW % block == 0) is a pure reshape.
        x_flat = jnp.pad(x_flat, ((0, 0), (0, 0), (0, hw_pad - HW)))
    x_tiled = x_flat.reshape(N, Cin, slabs_pad, _LANE)

    step_vmem = 2 * (Cin + _N_OUT) * S * _LANE * itemsize
    vmem_limit = int(min(max(4 * step_vmem, 16 << 20), 40 << 20))

    out_tiled = pl.pallas_call(
        _head3_kernel,
        out_shape=jax.ShapeDtypeStruct((N, _N_OUT, slabs_pad, _LANE), x_nchw.dtype),
        grid_spec=pltpu.PrefetchScalarGridSpec(
            num_scalar_prefetch=0,
            grid=(N, n_blocks),
            in_specs=[
                pl.BlockSpec(memory_space=pltpu.MemorySpace.SMEM),   # fused (4, Cin) weight
                pl.BlockSpec(memory_space=pltpu.MemorySpace.SMEM),   # fused (4,) bias
                pl.BlockSpec((None, Cin, S, _LANE), lambda n, j: (n, 0, j, 0)),
            ],
            out_specs=pl.BlockSpec((None, _N_OUT, S, _LANE), lambda n, j: (n, 0, j, 0)),
        ),
        compiler_params=pltpu.CompilerParams(
            dimension_semantics=("parallel", "parallel"),
            vmem_limit_bytes=vmem_limit),
    )(w_fused, b_fused, x_tiled)

    out_flat = out_tiled.reshape(N, _N_OUT, hw_pad)
    if hw_pad != HW:
        out_flat = out_flat[:, :, :HW]
    return out_flat.reshape(N, _N_OUT, H, W)


def _init_params(in_channels, key):
    """Deterministic init mirroring nn.Conv2d default (kaiming-uniform-ish)."""
    k1, k2, k3, k4 = jax.random.split(key, 4)
    bound1 = 1.0 / (in_channels ** 0.5)
    w1 = jax.random.uniform(k1, (3, in_channels, 1, 1), jnp.float32, -bound1, bound1)
    b1 = jax.random.uniform(k2, (3,), jnp.float32, -bound1, bound1)
    bound2 = 1.0 / (3 ** 0.5)
    w2 = jax.random.uniform(k3, (1, 3, 1, 1), jnp.float32, -bound2, bound2)
    b2 = jax.random.uniform(k4, (1,), jnp.float32, -bound2, bound2)
    return w1, b1, w2, b2


def _reference(x_nchw, w1, b1, w2, b2):
    # Pure-JAX reference of the PyTorch forward (unfused 1x1 convs as einsums).
    out1 = jnp.einsum("nchw,oc->nohw", x_nchw, w1.reshape(3, -1)) + b1[None, :, None, None]
    out2 = jnp.einsum("nchw,oc->nohw", out1, w2.reshape(1, 3)) + b2[None, :, None, None]
    return jnp.concatenate([out1, out2], axis=1)


if __name__ == "__main__":
    key = jax.random.PRNGKey(0)
    k_x, k_p = jax.random.split(key)

    N, Cin, H, W = 2, 4, 16, 16
    x = jax.random.normal(k_x, (N, Cin, H, W), jnp.float32)
    w1, b1, w2, b2 = _init_params(Cin, k_p)

    out = jax.block_until_ready(dglnet_head3(x, w1, b1, w2, b2))

    ref = _reference(x, w1, b1, w2, b2)
    assert out.shape == (N, 4, H, W)
    assert jnp.allclose(out, ref, atol=1e-5, rtol=1e-5), "mismatch vs reference"

    print("KERNEL_OK")
</pallas_src>

<mosaic_0001>
module attributes {stable_mosaic.version = 11 : i64} {
  func.func @_head3_kernel(%arg0: i32, %arg1: i32, %arg2: memref<4x4xf32, #tpu.memory_space<smem>>, %arg3: memref<4xf32, #tpu.memory_space<smem>>, %arg4: memref<1x4x2x128xf32, #tpu.memory_space<vmem>>, %arg5: memref<1x4x2x128xf32, #tpu.memory_space<vmem>>) attributes {dimension_semantics = [#tpu.dimension_semantics<parallel>, #tpu.dimension_semantics<parallel>], iteration_bounds = array<i64: 2, 1>, scalar_prefetch = 0 : i64, scratch_operands = 0 : i64, tpu.core_type = #tpu.core_type<tc>, window_params = [{transform_indices = @transform_0, window_bounds = array<i64: 4, 4>}, {transform_indices = @transform_1, window_bounds = array<i64: 4>}, {transform_indices = @transform_2, window_bounds = array<i64: 1, 4, 2, 128>}, {transform_indices = @transform_3, window_bounds = array<i64: 1, 4, 2, 128>}]} {
    %c0 = arith.constant 0 : index
    %c0_0 = arith.constant 0 : index
    %c0_1 = arith.constant 0 : index
    %c0_2 = arith.constant 0 : index
    %0 = vector.load %arg4[%c0, %c0_0, %c0_1, %c0_2] : memref<1x4x2x128xf32, #tpu.memory_space<vmem>>, vector<1x1x2x128xf32>
    %1 = vector.shape_cast %0 : vector<1x1x2x128xf32> to vector<2x128xf32>
    %c0_3 = arith.constant 0 : index
    %c0_4 = arith.constant 0 : index
    %2 = memref.load %arg2[%c0_3, %c0_4] : memref<4x4xf32, #tpu.memory_space<smem>>
    %3 = vector.broadcast %2 : f32 to vector<2x128xf32>
    %4 = arith.mulf %1, %3 : vector<2x128xf32>
    %c0_5 = arith.constant 0 : index
    %5 = memref.load %arg3[%c0_5] : memref<4xf32, #tpu.memory_space<smem>>
    %6 = vector.broadcast %5 : f32 to vector<2x128xf32>
    %7 = arith.addf %4, %6 : vector<2x128xf32>
    %c1 = arith.constant 1 : index
    %c0_6 = arith.constant 0 : index
    %8 = memref.load %arg2[%c1, %c0_6] : memref<4x4xf32, #tpu.memory_space<smem>>
    %9 = vector.broadcast %8 : f32 to vector<2x128xf32>
    %10 = arith.mulf %1, %9 : vector<2x128xf32>
    %c1_7 = arith.constant 1 : index
    %11 = memref.load %arg3[%c1_7] : memref<4xf32, #tpu.memory_space<smem>>
    %12 = vector.broadcast %11 : f32 to vector<2x128xf32>
    %13 = arith.addf %10, %12 : vector<2x128xf32>
    %c2 = arith.constant 2 : index
    %c0_8 = arith.constant 0 : index
    %14 = memref.load %arg2[%c2, %c0_8] : memref<4x4xf32, #tpu.memory_space<smem>>
    %15 = vector.broadcast %14 : f32 to vector<2x128xf32>
    %16 = arith.mulf %1, %15 : vector<2x128xf32>
    %c2_9 = arith.constant 2 : index
    %17 = memref.load %arg3[%c2_9] : memref<4xf32, #tpu.memory_space<smem>>
    %18 = vector.broadcast %17 : f32 to vector<2x128xf32>
    %19 = arith.addf %16, %18 : vector<2x128xf32>
    %c3 = arith.constant 3 : index
    %c0_10 = arith.constant 0 : index
    %20 = memref.load %arg2[%c3, %c0_10] : memref<4x4xf32, #tpu.memory_space<smem>>
    %21 = vector.broadcast %20 : f32 to vector<2x128xf32>
    %22 = arith.mulf %1, %21 : vector<2x128xf32>
    %c3_11 = arith.constant 3 : index
    %23 = memref.load %arg3[%c3_11] : memref<4xf32, #tpu.memory_space<smem>>
    %24 = vector.broadcast %23 : f32 to vector<2x128xf32>
    %25 = arith.addf %22, %24 : vector<2x128xf32>
    %c0_12 = arith.constant 0 : index
    %c1_13 = arith.constant 1 : index
    %c0_14 = arith.constant 0 : index
    %c0_15 = arith.constant 0 : index
    %26 = vector.load %arg4[%c0_12, %c1_13, %c0_14, %c0_15] : memref<1x4x2x128xf32, #tpu.memory_space<vmem>>, vector<1x1x2x128xf32>
    %27 = vector.shape_cast %26 : vector<1x1x2x128xf32> to vector<2x128xf32>
    %c0_16 = arith.constant 0 : index
    %c1_17 = arith.constant 1 : index
    %28 = memref.load %arg2[%c0_16, %c1_17] : memref<4x4xf32, #tpu.memory_space<smem>>
    %29 = vector.broadcast %28 : f32 to vector<2x128xf32>
    %30 = arith.mulf %27, %29 : vector<2x128xf32>
    %31 = arith.addf %7, %30 : vector<2x128xf32>
    %c1_18 = arith.constant 1 : index
    %c1_19 = arith.constant 1 : index
    %32 = memref.load %arg2[%c1_18, %c1_19] : memref<4x4xf32, #tpu.memory_space<smem>>
    %33 = vector.broadcast %32 : f32 to vector<2x128xf32>
    %34 = arith.mulf %27, %33 : vector<2x128xf32>
    %35 = arith.addf %13, %34 : vector<2x128xf32>
    %c2_20 = arith.constant 2 : index
    %c1_21 = arith.constant 1 : index
    %36 = memref.load %arg2[%c2_20, %c1_21] : memref<4x4xf32, #tpu.memory_space<smem>>
    %37 = vector.broadcast %36 : f32 to vector<2x128xf32>
    %38 = arith.mulf %27, %37 : vector<2x128xf32>
    %39 = arith.addf %19, %38 : vector<2x128xf32>
    %c3_22 = arith.constant 3 : index
    %c1_23 = arith.constant 1 : index
    %40 = memref.load %arg2[%c3_22, %c1_23] : memref<4x4xf32, #tpu.memory_space<smem>>
    %41 = vector.broadcast %40 : f32 to vector<2x128xf32>
    %42 = arith.mulf %27, %41 : vector<2x128xf32>
    %43 = arith.addf %25, %42 : vector<2x128xf32>
    %c0_24 = arith.constant 0 : index
    %c2_25 = arith.constant 2 : index
    %c0_26 = arith.constant 0 : index
    %c0_27 = arith.constant 0 : index
    %44 = vector.load %arg4[%c0_24, %c2_25, %c0_26, %c0_27] : memref<1x4x2x128xf32, #tpu.memory_space<vmem>>, vector<1x1x2x128xf32>
    %45 = vector.shape_cast %44 : vector<1x1x2x128xf32> to vector<2x128xf32>
    %c0_28 = arith.constant 0 : index
    %c2_29 = arith.constant 2 : index
    %46 = memref.load %arg2[%c0_28, %c2_29] : memref<4x4xf32, #tpu.memory_space<smem>>
    %47 = vector.broadcast %46 : f32 to vector<2x128xf32>
    %48 = arith.mulf %45, %47 : vector<2x128xf32>
    %49 = arith.addf %31, %48 : vector<2x128xf32>
    %c1_30 = arith.constant 1 : index
    %c2_31 = arith.constant 2 : index
    %50 = memref.load %arg2[%c1_30, %c2_31] : memref<4x4xf32, #tpu.memory_space<smem>>
    %51 = vector.broadcast %50 : f32 to vector<2x128xf32>
    %52 = arith.mulf %45, %51 : vector<2x128xf32>
    %53 = arith.addf %35, %52 : vector<2x128xf32>
    %c2_32 = arith.constant 2 : index
    %c2_33 = arith.constant 2 : index
    %54 = memref.load %arg2[%c2_32, %c2_33] : memref<4x4xf32, #tpu.memory_space<smem>>
    %55 = vector.broadcast %54 : f32 to vector<2x128xf32>
    %56 = arith.mulf %45, %55 : vector<2x128xf32>
    %57 = arith.addf %39, %56 : vector<2x128xf32>
    %c3_34 = arith.constant 3 : index
    %c2_35 = arith.constant 2 : index
    %58 = memref.load %arg2[%c3_34, %c2_35] : memref<4x4xf32, #tpu.memory_space<smem>>
    %59 = vector.broadcast %58 : f32 to vector<2x128xf32>
    %60 = arith.mulf %45, %59 : vector<2x128xf32>
    %61 = arith.addf %43, %60 : vector<2x128xf32>
    %c0_36 = arith.constant 0 : index
    %c3_37 = arith.constant 3 : index
    %c0_38 = arith.constant 0 : index
    %c0_39 = arith.constant 0 : index
    %62 = vector.load %arg4[%c0_36, %c3_37, %c0_38, %c0_39] : memref<1x4x2x128xf32, #tpu.memory_space<vmem>>, vector<1x1x2x128xf32>
    %63 = vector.shape_cast %62 : vector<1x1x2x128xf32> to vector<2x128xf32>
    %c0_40 = arith.constant 0 : index
    %c3_41 = arith.constant 3 : index
    %64 = memref.load %arg2[%c0_40, %c3_41] : memref<4x4xf32, #tpu.memory_space<smem>>
    %65 = vector.broadcast %64 : f32 to vector<2x128xf32>
    %66 = arith.mulf %63, %65 : vector<2x128xf32>
    %67 = arith.addf %49, %66 : vector<2x128xf32>
    %c1_42 = arith.constant 1 : index
    %c3_43 = arith.constant 3 : index
    %68 = memref.load %arg2[%c1_42, %c3_43] : memref<4x4xf32, #tpu.memory_space<smem>>
    %69 = vector.broadcast %68 : f32 to vector<2x128xf32>
    %70 = arith.mulf %63, %69 : vector<2x128xf32>
    %71 = arith.addf %53, %70 : vector<2x128xf32>
    %c2_44 = arith.constant 2 : index
    %c3_45 = arith.constant 3 : index
    %72 = memref.load %arg2[%c2_44, %c3_45] : memref<4x4xf32, #tpu.memory_space<smem>>
    %73 = vector.broadcast %72 : f32 to vector<2x128xf32>
    %74 = arith.mulf %63, %73 : vector<2x128xf32>
    %75 = arith.addf %57, %74 : vector<2x128xf32>
    %c3_46 = arith.constant 3 : index
    %c3_47 = arith.constant 3 : index
    %76 = memref.load %arg2[%c3_46, %c3_47] : memref<4x4xf32, #tpu.memory_space<smem>>
    %77 = vector.broadcast %76 : f32 to vector<2x128xf32>
    %78 = arith.mulf %63, %77 : vector<2x128xf32>
    %79 = arith.addf %61, %78 : vector<2x128xf32>
    %c0_48 = arith.constant 0 : index
    %c0_49 = arith.constant 0 : index
    %c0_50 = arith.constant 0 : index
    %c0_51 = arith.constant 0 : index
    %80 = vector.load %arg5[%c0_48, %c0_49, %c0_50, %c0_51] : memref<1x4x2x128xf32, #tpu.memory_space<vmem>>, vector<1x1x2x128xf32>
    %81 = vector.shape_cast %80 : vector<1x1x2x128xf32> to vector<2x128xf32>
    %82 = vector.shape_cast %67 : vector<2x128xf32> to vector<1x1x2x128xf32>
    tpu.vector_store %arg5[%c0_48, %c0_49, %c0_50, %c0_51], %82 {strides = array<i32>} : memref<1x4x2x128xf32, #tpu.memory_space<vmem>>, vector<1x1x2x128xf32>,
    %c0_52 = arith.constant 0 : index
    %c1_53 = arith.constant 1 : index
    %c0_54 = arith.constant 0 : index
    %c0_55 = arith.constant 0 : index
    %83 = vector.load %arg5[%c0_52, %c1_53, %c0_54, %c0_55] : memref<1x4x2x128xf32, #tpu.memory_space<vmem>>, vector<1x1x2x128xf32>
    %84 = vector.shape_cast %83 : vector<1x1x2x128xf32> to vector<2x128xf32>
    %85 = vector.shape_cast %71 : vector<2x128xf32> to vector<1x1x2x128xf32>
    tpu.vector_store %arg5[%c0_52, %c1_53, %c0_54, %c0_55], %85 {strides = array<i32>} : memref<1x4x2x128xf32, #tpu.memory_space<vmem>>, vector<1x1x2x128xf32>,
    %c0_56 = arith.constant 0 : index
    %c2_57 = arith.constant 2 : index
    %c0_58 = arith.constant 0 : index
    %c0_59 = arith.constant 0 : index
    %86 = vector.load %arg5[%c0_56, %c2_57, %c0_58, %c0_59] : memref<1x4x2x128xf32, #tpu.memory_space<vmem>>, vector<1x1x2x128xf32>
    %87 = vector.shape_cast %86 : vector<1x1x2x128xf32> to vector<2x128xf32>
    %88 = vector.shape_cast %75 : vector<2x128xf32> to vector<1x1x2x128xf32>
    tpu.vector_store %arg5[%c0_56, %c2_57, %c0_58, %c0_59], %88 {strides = array<i32>} : memref<1x4x2x128xf32, #tpu.memory_space<vmem>>, vector<1x1x2x128xf32>,
    %c0_60 = arith.constant 0 : index
    %c3_61 = arith.constant 3 : index
    %c0_62 = arith.constant 0 : index
    %c0_63 = arith.constant 0 : index
    %89 = vector.load %arg5[%c0_60, %c3_61, %c0_62, %c0_63] : memref<1x4x2x128xf32, #tpu.memory_space<vmem>>, vector<1x1x2x128xf32>
    %90 = vector.shape_cast %89 : vector<1x1x2x128xf32> to vector<2x128xf32>
    %91 = vector.shape_cast %79 : vector<2x128xf32> to vector<1x1x2x128xf32>
    tpu.vector_store %arg5[%c0_60, %c3_61, %c0_62, %c0_63], %91 {strides = array<i32>} : memref<1x4x2x128xf32, #tpu.memory_space<vmem>>, vector<1x1x2x128xf32>,
    return
  }
  func.func @transform_0(%arg0: i32, %arg1: i32) -> (i32, i32) {
    %c0_i32 = arith.constant 0 : i32
    %c0_i32_0 = arith.constant 0 : i32
    %c0_i32_1 = arith.constant 0 : i32
    return %c0_i32, %c0_i32_0 : i32, i32
  }
  func.func @transform_1(%arg0: i32, %arg1: i32) -> i32 {
    %c0_i32 = arith.constant 0 : i32
    %c0_i32_0 = arith.constant 0 : i32
    return %c0_i32 : i32
  }
  func.func @transform_2(%arg0: i32, %arg1: i32) -> (i32, i32, i32, i32) {
    %c0_i32 = arith.constant 0 : i32
    %c0_i32_0 = arith.constant 0 : i32
    %c0_i32_1 = arith.constant 0 : i32
    return %arg0, %c0_i32, %arg1, %c0_i32_0 : i32, i32, i32, i32
  }
  func.func @transform_3(%arg0: i32, %arg1: i32) -> (i32, i32, i32, i32) {
    %c0_i32 = arith.constant 0 : i32
    %c0_i32_0 = arith.constant 0 : i32
    %c0_i32_1 = arith.constant 0 : i32
    return %arg0, %c0_i32, %arg1, %c0_i32_0 : i32, i32, i32, i32
  }
}

</mosaic_0001>

<llo_original>
// kernel: tpu_custom_call.1
$region0: #{tpu_custom_call.1}
  #allocation0 [shape = 'u32[]', space=smem, size = 0x4, offset = 0x4, fixed_abs, tag = 'smem constant byte address 0x4 - core index']
  #allocation1 [shape = 'u32[144,128]{1,0:T(1,128)}', space=vmem, size = 0x12000, scoped, tag = 'internal scratch']
  %s0 = inlined_call_operand.hbm [shape: f32[4,4], index: 0, kind: input, shape index: {}]
  %s1 = inlined_call_operand.vmem [shape: f32[4], index: 1, kind: input, shape index: {}]
  %s2 = inlined_call_operand.hbm [shape: f32[2,4,2,128], index: 2, kind: input, shape index: {}]
  %s3 = inlined_call_operand.hbm [shape: f32[2,4,2,128], index: 3, kind: output, shape index: {}]
  %s4 = sld [smem:[#allocation0]]
  $region57: #{tpu_custom_call.1} parent=0
    _
  %s6 = ssub.s32 1, %s4
  %s7 = scalar_select 0, %s6, %s4
  $region1: #{tpu_custom_call.1} parent=0
    #allocation2 [shape = 'u8[2048]{0}', space=smem, size = 0x800, scoped, tag = 'input window, operand 0, single buffered']
    #allocation3 [shape = 's32[2]{0}', space=sflag, size = 0x8, scoped, tag = 'scoped memory for tpu_custom_call.1']
    #allocation4 [shape = 's32[2]{0}', space=sflag, size = 0x8, scoped, tag = 'scoped memory for tpu_custom_call.1']
    #allocation5 [shape = 's32[2]{0}', space=sflag, size = 0x8, scoped, tag = 'scoped memory for tpu_custom_call.1']
    #allocation6 [shape = 's32[2]{0}', space=sflag, size = 0x8, scoped, tag = 'scoped memory for tpu_custom_call.1']
    #allocation7 [shape = 'u8[512]{0}', space=smem, size = 0x200, scoped, tag = 'input window, operand 1, single buffered']
    #allocation8 [shape = 'u8[8192]{0}', space=vmem, size = 0x2000, scoped, tag = 'input window, operand 2']
    #allocation9 [shape = 'u8[8192]{0}', space=vmem, size = 0x2000, scoped, tag = 'output window, operand 0']
    %8 = vsyncpa [#allocation5], 0
    %9 = vsyncpa [#allocation6], 0
    %10 = vsyncpa [#allocation3], 0
    %s11 = scalar_lea.sflag [#allocation3], 1
    %12 = vsyncpa %s11, 0
    %13 = vsyncpa [#allocation4], 0
    %s14 = scalar_lea.sflag [#allocation4], 1
    %15 = vsyncpa %s14, 0
    loop: start=0, step=1, limit=4
    $region2: #{tpu_custom_call.1} parent=1 // loop_pre_header
      _
    $region3: #{tpu_custom_call.1} parent=1 // loop_header
      %s17 = sphi 0, %s21
      %p18 = scmp.ge.s32.totalorder %s17, 4
      %s24 = sphi 0, %s36
      %s25 = sphi 0, %s32
      %s26 = sphi 0, %s24
      %s27 = sphi 0, %s25
      %s28 = sphi 0, %s26
      %s29 = sphi 0, %s27
      %s37 = sphi 0, %s37
      %s39 = sphi 0, %s37
      %s40 = sphi 0, %s39
      %s54 = sphi 0, %s40
      %s58 = sphi 0, %s58
      %s60 = sphi 0, %s58
      %s61 = sphi 0, %s60
      %s75 = sphi 0, %s61
      %s83 = sphi 0, %s85
      %s86 = sphi 0, %s83
      %s87 = sphi 0, %s86
      %s103 = sphi 0, %s87
      %s111 = sphi 0, %s113
      %s114 = sphi 0, %s111
      %s115 = sphi 0, %s114
      %s131 = sphi 0, %s115
    $region4: #{tpu_custom_call.1} parent=1 // loop_header_branch
      %20 = sbr.rel (%p18) target = $region8
    $region5: #{tpu_custom_call.1} parent=1 // loop_body
      %s22 = ssub.s32 %s17, 1
      %s23 = ssub.s32 %s17, 2
      %s30 = sadd.s32 1, %s25
      %p31 = scmp.ge.s32.totalorder %s30, 1
      %s32 = scalar_select %p31, 0, %s30
      %s33 = sadd.s32 1, %s24
      %s34 = scalar_select %p31, %s33, %s24
      %p35 = scmp.ge.s32.totalorder %s34, 2
      %s36 = scalar_select %p35, 0, %s34
      %s38 = sadd.s32 %s37, 1
      %p41 = scmp.eq.s32.totalorder %s17, 1
      %p42 = scmp.ne.s32.totalorder %s37, %s39
      %p43 = scmp.eq.s32.totalorder %s17, 0
      %p44 = por %p42, %p43
      %p45 = scmp.ne.s32.totalorder %s37, %s39
      %p46 = scmp.eq.s32.totalorder %s22, 1
      %p47 = por %p45, %p46
      %p48 = scmp.ne.s32.totalorder %s39, %s40
      %p49 = scmp.eq.s32.totalorder %s22, 0
      %p50 = por %p48, %p49
      %p51 = scmp.ne.s32.totalorder %s39, %s40
      %p52 = scmp.eq.s32.totalorder %s23, 1
      %p53 = por %p51, %p52
      %p55 = scmp.ne.s32.totalorder %s40, %s54
      %p56 = scmp.eq.s32.totalorder %s23, 0
      %p57 = por %p55, %p56
      %s59 = sadd.s32 %s58, 1
      %p62 = scmp.eq.s32.totalorder %s17, 1
      %p63 = scmp.ne.s32.totalorder %s58, %s60
      %p64 = scmp.eq.s32.totalorder %s17, 0
      %p65 = por %p63, %p64
      %p66 = scmp.ne.s32.totalorder %s58, %s60
      %p67 = scmp.eq.s32.totalorder %s22, 1
      %p68 = por %p66, %p67
      %p69 = scmp.ne.s32.totalorder %s60, %s61
      %p70 = scmp.eq.s32.totalorder %s22, 0
      %p71 = por %p69, %p70
      %p72 = scmp.ne.s32.totalorder %s60, %s61
      %p73 = scmp.eq.s32.totalorder %s23, 1
      %p74 = por %p72, %p73
      %p76 = scmp.ne.s32.totalorder %s61, %s75
      %p77 = scmp.eq.s32.totalorder %s23, 0
      %p78 = por %p76, %p77
      %s79 = ssub.s32 %s24, %s36
      %s80 = ssub.s32 %s25, %s32
      %s81 = sor.u32 %s79, %s80
      %p82 = scmp.eq.s32.totalorder %s81, 0
      %s84 = sadd.s32 %s83, 1
      %s85 = scalar_select %p82, %s83, %s84
      %p88 = pneg %p82
      %p89 = scmp.eq.s32.totalorder %s17, 1
      %p90 = por %p88, %p89
      %p91 = scmp.ne.s32.totalorder %s83, %s86
      %p92 = scmp.eq.s32.totalorder %s17, 0
      %p93 = por %p91, %p92
      %p94 = scmp.ne.s32.totalorder %s83, %s86
      %p95 = scmp.eq.s32.totalorder %s22, 1
      %p96 = por %p94, %p95
      %p97 = scmp.ne.s32.totalorder %s86, %s87
      %p98 = scmp.eq.s32.totalorder %s22, 0
      %p99 = por %p97, %p98
      %p100 = scmp.ne.s32.totalorder %s86, %s87
      %p101 = scmp.eq.s32.totalorder %s23, 1
      %p102 = por %p100, %p101
      %p104 = scmp.ne.s32.totalorder %s87, %s103
      %p105 = scmp.eq.s32.totalorder %s23, 0
      %p106 = por %p104, %p105
      %s107 = ssub.s32 %s24, %s36
      %s108 = ssub.s32 %s25, %s32
      %s109 = sor.u32 %s107, %s108
      %p110 = scmp.eq.s32.totalorder %s109, 0
      %s112 = sadd.s32 %s111, 1
      %s113 = scalar_select %p110, %s111, %s112
      %p116 = pneg %p110
      %p117 = scmp.eq.s32.totalorder %s17, 1
      %p118 = por %p116, %p117
      %p119 = scmp.ne.s32.totalorder %s111, %s114
      %p120 = scmp.eq.s32.totalorder %s17, 0
      %p121 = por %p119, %p120
      %p122 = scmp.ne.s32.totalorder %s111, %s114
      %p123 = scmp.eq.s32.totalorder %s22, 1
      %p124 = por %p122, %p123
      %p125 = scmp.ne.s32.totalorder %s114, %s115
      %p126 = scmp.eq.s32.totalorder %s22, 0
      %p127 = por %p125, %p126
      %p128 = scmp.ne.s32.totalorder %s114, %s115
      %p129 = scmp.eq.s32.totalorder %s23, 1
      %p130 = por %p128, %p129
      %p132 = scmp.ne.s32.totalorder %s115, %s131
      %p133 = scmp.eq.s32.totalorder %s23, 0
      %p134 = por %p132, %p133
      %p135 = scmp.le.s32.totalorder 1, %s17
      %p136 = scmp.lt.s32.totalorder %s17, 3
      %p137 = pnand %p135, %p136
      %p138 = pneg %p137
      // Predicated region
      $region9: #{tpu_custom_call.1} parent=5 // pred_check
        _
      $region10: #{tpu_custom_call.1} parent=5 // pred_check_branch
        %140 = sbr.rel (%p137) target = $region12
      $region11: #{tpu_custom_call.1} parent=5 // pred_region
        %s141 = ssub.s32 %s17, 1
        // Predicated region
        $region13: #{tpu_custom_call.1} parent=11 // pred_check
          %p142 = pneg %p50
        $region14: #{tpu_custom_call.1} parent=11 // pred_check_branch
          %144 = sbr.rel (%p142) target = $region16
        $region15: #{tpu_custom_call.1} parent=11 // pred_region
          %s146 = ssub.s32 64, 64
          %147 = vsyncadd [#allocation5], %s146
          %150 = dma.hbm_to_smem %s0, 64, [#allocation2], [#allocation5]
        $region16: #{tpu_custom_call.1} parent=11 // pred_fallthru
          _
        // Predicated region
        $region17: #{tpu_custom_call.1} parent=11 // pred_check
          %p151 = pneg %p71
        $region18: #{tpu_custom_call.1} parent=11 // pred_check_branch
          %153 = sbr.rel (%p151) target = $region20
        $region19: #{tpu_custom_call.1} parent=11 // pred_region
          %s155 = ssub.s32 16, 16
          %156 = vsyncadd [#allocation6], %s155
          %s158 = sshll.u32 %s1, 4
          %s159 = int_to_ptr.vmem [resolvable:$true] %s158
          %161 = dma.vmem_to_smem %s159, 16, [#allocation7], [#allocation6]
        $region20: #{tpu_custom_call.1} parent=11 // pred_fallthru
          _
      $region12: #{tpu_custom_call.1} parent=5 // pred_fallthru
        _
      %p162 = scmp.lt.s32.totalorder %s17, 2
      // Predicated region
      $region21: #{tpu_custom_call.1} parent=5 // pred_check
        %p163 = pneg %p162
      $region22: #{tpu_custom_call.1} parent=5 // pred_check_branch
        %165 = sbr.rel (%p163) target = $region24
      $region23: #{tpu_custom_call.1} parent=5 // pred_region
        // Predicated region
        $region25: #{tpu_custom_call.1} parent=23 // pred_check
          %p166 = pneg %p93
        $region26: #{tpu_custom_call.1} parent=23 // pred_check_branch
          %168 = sbr.rel (%p166) target = $region28
        $region27: #{tpu_custom_call.1} parent=23 // pred_region
          %s169 = sand.u32 %s83, 1
          %s170 = scalar_lea.sflag [#allocation3], %s169
          %s171 = sand.u32 %s83, 1
          %s172 = smul.addr %s171, 8
          %s173 = scalar_lea.vmem [#allocation8], %s172
          %s175 = ssub.s32 128, 128
          %176 = vsyncadd %s170, %s175
          %s177 = smul.addr %s24, 4
          %s178 = sadd.s32 %s25, %s177
          %s179 = smul.addr %s178, 32
          %s180 = scalar_lea.hbm %s2, %s179
          %s181 = sshll.u32 %s173, 4
          %s182 = int_to_ptr.vmem [resolvable:$true] %s181
          %187 = dma.hbm_to_vmem [thread:$0]  %s180, 128, %s182, %s170, 32, 32, 2
        $region28: #{tpu_custom_call.1} parent=23 // pred_fallthru
          _
      $region24: #{tpu_custom_call.1} parent=5 // pred_fallthru
        _
      %p188 = scmp.le.s32.totalorder 1, %s17
      %p189 = scmp.lt.s32.totalorder %s17, 3
      %p190 = pnand %p188, %p189
      %p191 = pneg %p190
      // Predicated region
      $region29: #{tpu_custom_call.1} parent=5 // pred_check
        _
      $region30: #{tpu_custom_call.1} parent=5 // pred_check_branch
        %193 = sbr.rel (%p190) target = $region32
      $region31: #{tpu_custom_call.1} parent=5 // pred_region
        %s194 = ssub.s32 %s17, 1
        // Predicated region
        $region33: #{tpu_custom_call.1} parent=31 // pred_check
          %p195 = pneg %p50
        $region34: #{tpu_custom_call.1} parent=31 // pred_check_branch
          %197 = sbr.rel (%p195) target = $region36
        $region35: #{tpu_custom_call.1} parent=31 // pred_region
          %198 = dma.done [#allocation5], 64
        $region36: #{tpu_custom_call.1} parent=31 // pred_fallthru
          _
        // Predicated region
        $region37: #{tpu_custom_call.1} parent=31 // pred_check
          %p199 = pneg %p71
        $region38: #{tpu_custom_call.1} parent=31 // pred_check_branch
          %201 = sbr.rel (%p199) target = $region40
        $region39: #{tpu_custom_call.1} parent=31 // pred_region
          %202 = dma.done [#allocation6], 16
        $region40: #{tpu_custom_call.1} parent=31 // pred_fallthru
          _
        %s203 = sand.u32 %s86, 1
        %s204 = scalar_lea.sflag [#allocation3], %s203
        %s205 = sand.u32 %s86, 1
        %s206 = smul.addr %s205, 8
        %s207 = scalar_lea.vmem [#allocation8], %s206
        // Predicated region
        $region41: #{tpu_custom_call.1} parent=31 // pred_check
          %p208 = pneg %p99
        $region42: #{tpu_custom_call.1} parent=31 // pred_check_branch
          %210 = sbr.rel (%p208) target = $region44
        $region43: #{tpu_custom_call.1} parent=31 // pred_region
          %211 = dma.done %s204, 128
        $region44: #{tpu_custom_call.1} parent=31 // pred_fallthru
          _
        %212 = sfence
        %p213 = pneg %p50
        %p214 = pneg %p47
        %p215 = pneg %p71
        %p216 = pneg %p68
        %s217 = sand.u32 %s86, 1
        %s218 = scalar_lea.sflag [#allocation3], %s217
        %s219 = sand.u32 %s86, 1
        %s220 = smul.addr %s219, 8
        %s221 = scalar_lea.vmem [#allocation8], %s220
        %p222 = pneg %p99
        %p223 = pneg %p96
        %p224 = pneg %p127
        %p225 = pneg %p124
        %s226 = sand.u32 %s114, 1
        %s227 = scalar_lea.sflag [#allocation4], %s226
        %s228 = sand.u32 %s114, 1
        %s229 = smul.addr %s228, 8
        %s230 = scalar_lea.vmem [#allocation9], %s229
        %v231 = vld [vmem:[%s207] sm:$0x3]
        %s232 = sld [smem:[#allocation2]]
        %v233 = vstv %s232
        %v234 = vmul.f32 %v231, %v233
        %s235 = sld [smem:[#allocation7]]
        %v236 = vstv %s235
        %v237 = vadd.f32 %v234, %v236
        %s238 = sld [smem:[#allocation2 + $0x80]]
        %v239 = vstv %s238
        %v240 = vmul.f32 %v231, %v239
        %s241 = sld [smem:[#allocation7 + $0x1]]
        %v242 = vstv %s241
        %v243 = vadd.f32 %v240, %v242
        %s244 = sld [smem:[#allocation2 + $0x100]]
        %v245 = vstv %s244
        %v246 = vmul.f32 %v231, %v245
        %s247 = sld [smem:[#allocation7 + $0x2]]
        %v248 = vstv %s247
        %v249 = vadd.f32 %v246, %v248
        %s250 = sld [smem:[#allocation2 + $0x180]]
        %v251 = vstv %s250
        %v252 = vmul.f32 %v231, %v251
        %s253 = sld [smem:[#allocation7 + $0x3]]
        %v254 = vstv %s253
        %v255 = vadd.f32 %v252, %v254
        %s256 = scalar_lea.vmem %s207, 2 [#allocation8]
        %v257 = vld [vmem:[%s256] sm:$0x3]
        %s258 = sld [smem:[#allocation2 + $0x1]]
        %v259 = vstv %s258
        %v260 = vmul.f32 %v257, %v259
        %v261 = vadd.f32 %v237, %v260
        %s262 = sld [smem:[#allocation2 + $0x81]]
        %v263 = vstv %s262
        %v264 = vmul.f32 %v257, %v263
        %v265 = vadd.f32 %v243, %v264
        %s266 = sld [smem:[#allocation2 + $0x101]]
        %v267 = vstv %s266
        %v268 = vmul.f32 %v257, %v267
        %v269 = vadd.f32 %v249, %v268
        %s270 = sld [smem:[#allocation2 + $0x181]]
        %v271 = vstv %s270
        %v272 = vmul.f32 %v257, %v271
        %v273 = vadd.f32 %v255, %v272
        %s274 = scalar_lea.vmem %s207, 4 [#allocation8]
        %v275 = vld [vmem:[%s274] sm:$0x3]
        %s276 = sld [smem:[#allocation2 + $0x2]]
        %v277 = vstv %s276
        %v278 = vmul.f32 %v275, %v277
        %v279 = vadd.f32 %v261, %v278
        %s280 = sld [smem:[#allocation2 + $0x82]]
        %v281 = vstv %s280
        %v282 = vmul.f32 %v275, %v281
        %v283 = vadd.f32 %v265, %v282
        %s284 = sld [smem:[#allocation2 + $0x102]]
        %v285 = vstv %s284
        %v286 = vmul.f32 %v275, %v285
        %v287 = vadd.f32 %v269, %v286
        %s288 = sld [smem:[#allocation2 + $0x182]]
        %v289 = vstv %s288
        %v290 = vmul.f32 %v275, %v289
        %v291 = vadd.f32 %v273, %v290
        %s292 = scalar_lea.vmem %s207, 6 [#allocation8]
        %v293 = vld [vmem:[%s292] sm:$0x3]
        %s294 = sld [smem:[#allocation2 + $0x3]]
        %v295 = vstv %s294
        %v296 = vmul.f32 %v293, %v295
        %v297 = vadd.f32 %v279, %v296
        %s298 = sld [smem:[#allocation2 + $0x83]]
        %v299 = vstv %s298
        %v300 = vmul.f32 %v293, %v299
        %v301 = vadd.f32 %v283, %v300
        %s302 = sld [smem:[#allocation2 + $0x103]]
        %v303 = vstv %s302
        %v304 = vmul.f32 %v293, %v303
        %v305 = vadd.f32 %v287, %v304
        %s306 = sld [smem:[#allocation2 + $0x183]]
        %v307 = vstv %s306
        %v308 = vmul.f32 %v293, %v307
        %v309 = vadd.f32 %v291, %v308
        %310 = vst [vmem:[%s230] sm:$0x3] %v297
        %s311 = scalar_lea.vmem %s230, 2 [#allocation9]
        %312 = vst [vmem:[%s311] sm:$0x3] %v301
        %s313 = scalar_lea.vmem %s230, 4 [#allocation9]
        %314 = vst [vmem:[%s313] sm:$0x3] %v305
        %s315 = scalar_lea.vmem %s230, 6 [#allocation9]
        %316 = vst [vmem:[%s315] sm:$0x3] %v309
        %s317 = sand.u32 %s114, 1
        %s318 = scalar_lea.sflag [#allocation4], %s317
        %s319 = sand.u32 %s114, 1
        %s320 = smul.addr %s319, 8
        %s321 = scalar_lea.vmem [#allocation9], %s320
        // Predicated region
        $region45: #{tpu_custom_call.1} parent=31 // pred_check
          %p322 = pneg %p124
        $region46: #{tpu_custom_call.1} parent=31 // pred_check_branch
          %324 = sbr.rel (%p322) target = $region48
        $region47: #{tpu_custom_call.1} parent=31 // pred_region
          %s326 = ssub.s32 128, 128
          %327 = vsyncadd %s318, %s326
          %s328 = smul.addr %s26, 4
          %s329 = sadd.s32 %s27, %s328
          %s330 = smul.addr %s329, 32
          %s331 = scalar_lea.hbm %s3, %s330
          %s332 = sshll.u32 %s321, 4
          %s333 = int_to_ptr.vmem [resolvable:$true] %s332
          %338 = dma.vmem_to_hbm [thread:$0]  %s333, 128, %s331, %s318, 32, 32, 2
        $region48: #{tpu_custom_call.1} parent=31 // pred_fallthru
          _
      $region32: #{tpu_custom_call.1} parent=5 // pred_fallthru
        _
      %p339 = scmp.le.s32.totalorder 2, %s17
      // Predicated region
      $region49: #{tpu_custom_call.1} parent=5 // pred_check
        %p340 = pneg %p339
      $region50: #{tpu_custom_call.1} parent=5 // pred_check_branch
        %342 = sbr.rel (%p340) target = $region52
      $region51: #{tpu_custom_call.1} parent=5 // pred_region
        %s343 = ssub.s32 %s17, 2
        // Predicated region
        $region53: #{tpu_custom_call.1} parent=51 // pred_check
          %p344 = pneg %p130
        $region54: #{tpu_custom_call.1} parent=51 // pred_check_branch
          %346 = sbr.rel (%p344) target = $region56
        $region55: #{tpu_custom_call.1} parent=51 // pred_region
          %s347 = sand.u32 %s115, 1
          %s348 = scalar_lea.sflag [#allocation4], %s347
          %s349 = sand.u32 %s115, 1
          %s350 = smul.addr %s349, 8
          %s351 = scalar_lea.vmem [#allocation9], %s350
          %352 = dma.done %s348, 128
        $region56: #{tpu_custom_call.1} parent=51 // pred_fallthru
          _
      $region52: #{tpu_custom_call.1} parent=5 // pred_fallthru
        _
    $region6: #{tpu_custom_call.1} parent=1 // loop_footer
      %s21 = sadd.s32 1, %s17
    $region7: #{tpu_custom_call.1} parent=1 // loop_footer_branch
      %16 = sbr.rel target = $region3
    $region8: #{tpu_custom_call.1} parent=1 // loop_exit
      _
    %353 = vsyncpa [#allocation3], 1
    %s354 = scalar_lea.sflag [#allocation3], 1
    %355 = vsyncpa %s354, 1
    %356 = vsyncpa [#allocation4], 1
    %s357 = scalar_lea.sflag [#allocation4], 1
    %358 = vsyncpa %s357, 1
    %359 = vsyncpa [#allocation5], 1
    %s360 = scalar_lea.sflag [#allocation5], 1
    %361 = vsyncpa %s360, 1
    %362 = vsyncpa [#allocation6], 1
    %s363 = scalar_lea.sflag [#allocation6], 1
    %364 = vsyncpa %s363, 1

</llo_original>
